<compile_context>
chip_gen: v5e
topology: v5e:2x2
jax: 0.10.0
libtpu: 0.0.40
codegen_flags: <defaults>
</compile_context>

<pallas_src>
import functools

import jax
import jax.numpy as jnp
from jax import lax
from jax.experimental import pallas as pl
from jax.experimental.pallas import tpu as pltpu


def _round_up(x, m):
    return ((x + m - 1) // m) * m


def prep_kernel(e_ref, hi_ref, lo_ref):
    """Fused log_softmax + bf16 hi/lo split of one row tile of E."""
    e = e_ref[...]                                             # (tn1, M_pad) f32
    m = jnp.max(e, axis=1, keepdims=True)                      # (tn1, 1)
    z = m + jnp.log(jnp.sum(jnp.exp(e - m), axis=1, keepdims=True))
    logp = e - z                                               # row-wise log_softmax
    hi = logp.astype(jnp.bfloat16)
    lo = (logp - hi.astype(jnp.float32)).astype(jnp.bfloat16)
    hi_ref[...] = hi
    lo_ref[...] = lo


def gather_kernel(x_ref, hi_ref, lo_ref, o_ref, *, mk):
    """out[t, n] = logp[n, x_t]  ==  one-hot(T, M) @ logp_T(M, N)  (bf16 MXU)."""
    t_tile = o_ref.shape[0]
    tn = o_ref.shape[1]
    m_pad = hi_ref.shape[0]
    num_k = m_pad // mk

    # x arrives lane-oriented as (1, t_tile); the compare needs it as a
    # (t_tile, 1) column (T is the sublane axis of the output).  Do the tiny
    # relayout via the canonical 32-bit path: sublane-broadcast to 8 rows,
    # transpose, keep lane 0.
    x_row = x_ref[...]                                          # (1, t_tile) int32
    x_sub = jnp.broadcast_to(x_row, (8, t_tile))                # (8, t_tile)
    x_col = jnp.transpose(x_sub, (1, 0))[:, 0:1]                # (t_tile, 1)

    dnums = (((1,), (0,)), ((), ()))                            # (T,K) x (K,N) -> (T,N)
    one = jnp.bfloat16(1.0)
    zero = jnp.bfloat16(0.0)

    def one_chunk(start, acc):
        cols = start + lax.broadcasted_iota(jnp.int32, (t_tile, mk), 1)
        onehot = jnp.where(cols == x_col, one, zero)            # exact 0/1 in bf16
        acc = acc + lax.dot_general(onehot, hi_ref[pl.ds(start, mk), :], dnums,
                                    preferred_element_type=jnp.float32)
        acc = acc + lax.dot_general(onehot, lo_ref[pl.ds(start, mk), :], dnums,
                                    preferred_element_type=jnp.float32)
        return acc

    if num_k == 1:
        o_ref[...] = one_chunk(0, jnp.zeros((t_tile, tn), jnp.float32))
    else:
        # Stream M in chunks so the one-hot / iota temporaries stay bounded.
        def body(k, acc):
            return one_chunk(pl.multiple_of(k * mk, mk), acc)

        o_ref[...] = lax.fori_loop(0, num_k, body,
                                   jnp.zeros((t_tile, tn), jnp.float32))


def emission_forward(x_t, emission_matrix, *, t_tile_target=512):
    """x_t: (T,) int, emission_matrix: (N, M) f32  ->  (T, N) f32."""
    T = x_t.shape[0]
    N, M = emission_matrix.shape

    # ---- padding / tile choices --------------------------------------------
    N_pad = _round_up(N, 128)          # lane axis of the (T, N) output
    M_pad = _round_up(M, 128)          # contraction axis
    tn = 128                           # per-block output width (safe on v5e/v6e/v7x)
    tn1 = 64                           # small row tile for the prep pass

    if T >= t_tile_target:
        t_tile = t_tile_target
        T_pad = _round_up(T, t_tile)
    else:
        T_pad = _round_up(T, 8)
        t_tile = T_pad

    # M chunk for the in-kernel gather loop (bounds the one-hot temporaries).
    mk = M_pad if M_pad <= 1024 else max(c for c in (1024, 512, 256, 128)
                                         if M_pad % c == 0)

    # ---- pad inputs (tiny one-time XLA ops) --------------------------------
    e = emission_matrix.astype(jnp.float32)
    if M_pad > M:
        # Large-negative (not -inf) padding: contributes 0 to the normalizer
        # and can never produce inf - inf.
        e = jnp.pad(e, ((0, 0), (0, M_pad - M)), constant_values=-1e30)
    if N_pad > N:
        e = jnp.pad(e, ((0, N_pad - N), (0, 0)), constant_values=0.0)
    x = jnp.pad(x_t.astype(jnp.int32), (0, T_pad - T)).reshape(1, T_pad)

    # ---- kernel 1: log_softmax + bf16 hi/lo split (one pass over E) --------
    e_hi, e_lo = pl.pallas_call(
        prep_kernel,
        out_shape=(jax.ShapeDtypeStruct((N_pad, M_pad), jnp.bfloat16),
                   jax.ShapeDtypeStruct((N_pad, M_pad), jnp.bfloat16)),
        grid_spec=pltpu.PrefetchScalarGridSpec(
            num_scalar_prefetch=0,
            grid=(N_pad // tn1,),
            in_specs=[pl.BlockSpec((tn1, M_pad), lambda i: (i, 0))],
            out_specs=(pl.BlockSpec((tn1, M_pad), lambda i: (i, 0)),
                       pl.BlockSpec((tn1, M_pad), lambda i: (i, 0))),
        ),
        compiler_params=pltpu.CompilerParams(
            dimension_semantics=("parallel",),
            vmem_limit_bytes=64 * 1024 * 1024),
    )(e)
    # TODO(synk): for very large M, also stream M inside prep_kernel with an
    #             online max/sum accumulator instead of a full (tn1, M_pad) tile.

    # One-time XLA transpose so the gather matmul RHS is canonical (K, N).
    e_hi_t = jnp.transpose(e_hi)                                # (M_pad, N_pad) bf16
    e_lo_t = jnp.transpose(e_lo)                                # (M_pad, N_pad) bf16

    # ---- kernel 2: one-hot MXU gather ---------------------------------------
    n_tiles = N_pad // tn
    t_tiles = T_pad // t_tile

    if n_tiles == 1:
        # Single N tile: make T the leading parallel axis so v7x's two
        # TensorCores split the timesteps; the logp tile is resident throughout.
        grid = (t_tiles, n_tiles)
        x_map = lambda t, n: (0, t)
        e_map = lambda t, n: (0, n)
        o_map = lambda t, n: (t, n)
    else:
        # T innermost: the logp column tile is DMA'd once per N tile and stays
        # resident across the whole inner T loop.
        grid = (n_tiles, t_tiles)
        x_map = lambda n, t: (0, t)
        e_map = lambda n, t: (0, n)
        o_map = lambda n, t: (t, n)

    cost = pl.CostEstimate(
        flops=4 * T_pad * N_pad * M_pad,                        # two bf16 matmuls
        transcendentals=0,
        bytes_accessed=(T_pad * 4 + 2 * M_pad * N_pad * 2 + T_pad * N_pad * 4))

    out_p = pl.pallas_call(
        functools.partial(gather_kernel, mk=mk),
        out_shape=jax.ShapeDtypeStruct((T_pad, N_pad), jnp.float32),
        grid_spec=pltpu.PrefetchScalarGridSpec(
            num_scalar_prefetch=0,
            grid=grid,
            in_specs=[
                pl.BlockSpec((1, t_tile), x_map),               # x_t, lane-dense
                pl.BlockSpec((M_pad, tn), e_map),               # logp hi, (K, N)
                pl.BlockSpec((M_pad, tn), e_map),               # logp lo, (K, N)
            ],
            out_specs=pl.BlockSpec((t_tile, tn), o_map),
        ),
        compiler_params=pltpu.CompilerParams(
            dimension_semantics=("parallel", "parallel"),
            vmem_limit_bytes=64 * 1024 * 1024),
        cost_estimate=cost,
    )(x, e_hi_t, e_lo_t)
    # TODO(synk): on v7x, pipeline_mode=pl.Buffered(1) on the two logp specs
    #             would drop the redundant second buffer of the resident tile.

    return out_p[:T, :N]


if __name__ == "__main__":
    # Small deterministic setup mirroring EmissionModel(N, M) + a length-T
    # observation sequence: N hidden states, M observation symbols.
    N, M, T = 32, 128, 8
    key = jax.random.PRNGKey(0)
    k_e, k_x = jax.random.split(key)

    emission_matrix = jax.random.normal(k_e, (N, M), dtype=jnp.float32)  # ~ torch.randn(N, M)
    x_t = jax.random.randint(k_x, (T,), 0, M, dtype=jnp.int32)

    out = emission_forward(x_t, emission_matrix)
    out = jax.block_until_ready(out)

    # Pure-JAX reference.
    ref = jax.nn.log_softmax(emission_matrix, axis=1)[:, x_t].T           # (T, N)
    assert out.shape == (T, N)
    # bf16 hi/lo reconstruction error is bounded by 2^-16 * |logp| (< ~2e-4 here).
    assert jnp.allclose(out, ref, atol=5e-4, rtol=1e-4), \
        float(jnp.max(jnp.abs(out - ref)))

    print("KERNEL_OK")
</pallas_src>

<mosaic_0001>
module attributes {stable_mosaic.version = 11 : i64} {
  func.func @prep_kernel(%arg0: i32, %arg1: memref<64x128xf32, #tpu.memory_space<vmem>>, %arg2: memref<64x128xbf16, #tpu.memory_space<vmem>>, %arg3: memref<64x128xbf16, #tpu.memory_space<vmem>>) attributes {dimension_semantics = [#tpu.dimension_semantics<parallel>], iteration_bounds = array<i64: 2>, scalar_prefetch = 0 : i64, scratch_operands = 0 : i64, tpu.core_type = #tpu.core_type<tc>, window_params = [{transform_indices = @transform_0, window_bounds = array<i64: 64, 128>}, {transform_indices = @transform_1, window_bounds = array<i64: 64, 128>}, {transform_indices = @transform_2, window_bounds = array<i64: 64, 128>}]} {
    %c0 = arith.constant 0 : index
    %c0_0 = arith.constant 0 : index
    %0 = vector.load %arg1[%c0, %c0_0] : memref<64x128xf32, #tpu.memory_space<vmem>>, vector<64x128xf32>
    %cst = arith.constant dense<0xFF800000> : vector<64xf32>
    %1 = vector.multi_reduction <maximumf>, %0, %cst [1] : vector<64x128xf32> to vector<64xf32>
    %2 = vector.shape_cast %1 : vector<64xf32> to vector<64x1xf32>
    %3 = vector.broadcast %2 : vector<64x1xf32> to vector<64x128xf32>
    %4 = arith.subf %0, %3 : vector<64x128xf32>
    %5 = math.exp %4 : vector<64x128xf32>
    %cst_1 = arith.constant dense<0.000000e+00> : vector<64xf32>
    %6 = vector.multi_reduction <add>, %5, %cst_1 [1] : vector<64x128xf32> to vector<64xf32>
    %7 = vector.shape_cast %6 : vector<64xf32> to vector<64x1xf32>
    %8 = math.log %7 : vector<64x1xf32>
    %9 = arith.addf %2, %8 : vector<64x1xf32>
    %10 = vector.broadcast %9 : vector<64x1xf32> to vector<64x128xf32>
    %11 = arith.subf %0, %10 : vector<64x128xf32>
    %12 = arith.truncf %11 : vector<64x128xf32> to vector<64x128xbf16>
    %13 = arith.extf %12 : vector<64x128xbf16> to vector<64x128xf32>
    %14 = arith.subf %11, %13 : vector<64x128xf32>
    %15 = arith.truncf %14 : vector<64x128xf32> to vector<64x128xbf16>
    %c0_2 = arith.constant 0 : index
    %c0_3 = arith.constant 0 : index
    %16 = vector.load %arg2[%c0_2, %c0_3] : memref<64x128xbf16, #tpu.memory_space<vmem>>, vector<64x128xbf16>
    tpu.vector_store %arg2[%c0_2, %c0_3], %12 {strides = array<i32>} : memref<64x128xbf16, #tpu.memory_space<vmem>>, vector<64x128xbf16>,
    %c0_4 = arith.constant 0 : index
    %c0_5 = arith.constant 0 : index
    %17 = vector.load %arg3[%c0_4, %c0_5] : memref<64x128xbf16, #tpu.memory_space<vmem>>, vector<64x128xbf16>
    tpu.vector_store %arg3[%c0_4, %c0_5], %15 {strides = array<i32>} : memref<64x128xbf16, #tpu.memory_space<vmem>>, vector<64x128xbf16>,
    return
  }
  func.func @transform_0(%arg0: i32) -> (i32, i32) {
    %c0_i32 = arith.constant 0 : i32
    %c0_i32_0 = arith.constant 0 : i32
    return %arg0, %c0_i32 : i32, i32
  }
  func.func @transform_1(%arg0: i32) -> (i32, i32) {
    %c0_i32 = arith.constant 0 : i32
    %c0_i32_0 = arith.constant 0 : i32
    return %arg0, %c0_i32 : i32, i32
  }
  func.func @transform_2(%arg0: i32) -> (i32, i32) {
    %c0_i32 = arith.constant 0 : i32
    %c0_i32_0 = arith.constant 0 : i32
    return %arg0, %c0_i32 : i32, i32
  }
}

</mosaic_0001>

<llo_original>
// kernel: tpu_custom_call.1
$region0: #{tpu_custom_call.1}
  #allocation0 [shape = 'u32[]', space=smem, size = 0x4, offset = 0x4, fixed_abs, tag = 'smem constant byte address 0x4 - core index']
  #allocation1 [shape = 'u32[72,128]{1,0:T(1,128)}', space=vmem, size = 0x9000, scoped, tag = 'internal scratch']
  %s0 = inlined_call_operand.hbm [shape: f32[128,128], index: 0, kind: input, shape index: {}]
  %s1 = inlined_call_operand.hbm [shape: bf16[128,128], index: 1, kind: output, shape index: {0}]
  %s2 = inlined_call_operand.hbm [shape: bf16[128,128], index: 2, kind: output, shape index: {1}]
  %3 = xla_tuple %s1, %s2
  %s4 = sld [smem:[#allocation0]]
  $region49: #{tpu_custom_call.1} parent=0
    _
  %s6 = ssub.s32 1, %s4
  %s7 = scalar_select 0, %s6, %s4
  $region1: #{tpu_custom_call.1} parent=0
    #allocation2 [shape = 'u8[65536]{0}', space=vmem, size = 0x10000, scoped, tag = 'input window, operand 0']
    #allocation3 [shape = 's32[2]{0}', space=sflag, size = 0x8, scoped, tag = 'scoped memory for tpu_custom_call.1']
    #allocation4 [shape = 's32[2]{0}', space=sflag, size = 0x8, scoped, tag = 'scoped memory for tpu_custom_call.1']
    #allocation5 [shape = 'u8[32768]{0}', space=vmem, size = 0x8000, scoped, tag = 'output window, operand 0']
    #allocation6 [shape = 'u8[32768]{0}', space=vmem, size = 0x8000, scoped, tag = 'output window, operand 1']
    #allocation7 [shape = 's32[2]{0}', space=sflag, size = 0x8, scoped, tag = 'scoped memory for tpu_custom_call.1']
    %8 = vsyncpa [#allocation3], 0
    %s9 = scalar_lea.sflag [#allocation3], 1
    %10 = vsyncpa %s9, 0
    %11 = vsyncpa [#allocation4], 0
    %s12 = scalar_lea.sflag [#allocation4], 1
    %13 = vsyncpa %s12, 0
    %14 = vsyncpa [#allocation7], 0
    %s15 = scalar_lea.sflag [#allocation7], 1
    %16 = vsyncpa %s15, 0
    loop: start=0, step=1, limit=4
    $region2: #{tpu_custom_call.1} parent=1 // loop_pre_header
      _
    $region3: #{tpu_custom_call.1} parent=1 // loop_header
      %s18 = sphi 0, %s22
      %p19 = scmp.ge.s32.totalorder %s18, 4
      %s28 = sphi 0, %s30
      %s31 = sphi 0, %s28
      %s32 = sphi 0, %s31
      %s48 = sphi 0, %s32
      %s54 = sphi 0, %s56
      %s57 = sphi 0, %s54
      %s58 = sphi 0, %s57
      %s74 = sphi 0, %s58
      %s80 = sphi 0, %s82
      %s83 = sphi 0, %s80
      %s84 = sphi 0, %s83
      %s100 = sphi 0, %s84
    $region4: #{tpu_custom_call.1} parent=1 // loop_header_branch
      %21 = sbr.rel (%p19) target = $region8
    $region5: #{tpu_custom_call.1} parent=1 // loop_body
      %s23 = ssub.s32 %s18, 1
      %s24 = ssub.s32 %s18, 2
      %s25 = sadd.s32 %s18, 1
      %s26 = ssub.s32 %s18, %s25
      %p27 = scmp.eq.s32.totalorder %s26, 0
      %s29 = sadd.s32 %s28, 1
      %s30 = scalar_select %p27, %s28, %s29
      %p33 = pneg %p27
      %p34 = scmp.eq.s32.totalorder %s18, 1
      %p35 = por %p33, %p34
      %p36 = scmp.ne.s32.totalorder %s28, %s31
      %p37 = scmp.eq.s32.totalorder %s18, 0
      %p38 = por %p36, %p37
      %p39 = scmp.ne.s32.totalorder %s28, %s31
      %p40 = scmp.eq.s32.totalorder %s23, 1
      %p41 = por %p39, %p40
      %p42 = scmp.ne.s32.totalorder %s31, %s32
      %p43 = scmp.eq.s32.totalorder %s23, 0
      %p44 = por %p42, %p43
      %p45 = scmp.ne.s32.totalorder %s31, %s32
      %p46 = scmp.eq.s32.totalorder %s24, 1
      %p47 = por %p45, %p46
      %p49 = scmp.ne.s32.totalorder %s32, %s48
      %p50 = scmp.eq.s32.totalorder %s24, 0
      %p51 = por %p49, %p50
      %s52 = ssub.s32 %s18, %s25
      %p53 = scmp.eq.s32.totalorder %s52, 0
      %s55 = sadd.s32 %s54, 1
      %s56 = scalar_select %p53, %s54, %s55
      %p59 = pneg %p53
      %p60 = scmp.eq.s32.totalorder %s18, 1
      %p61 = por %p59, %p60
      %p62 = scmp.ne.s32.totalorder %s54, %s57
      %p63 = scmp.eq.s32.totalorder %s18, 0
      %p64 = por %p62, %p63
      %p65 = scmp.ne.s32.totalorder %s54, %s57
      %p66 = scmp.eq.s32.totalorder %s23, 1
      %p67 = por %p65, %p66
      %p68 = scmp.ne.s32.totalorder %s57, %s58
      %p69 = scmp.eq.s32.totalorder %s23, 0
      %p70 = por %p68, %p69
      %p71 = scmp.ne.s32.totalorder %s57, %s58
      %p72 = scmp.eq.s32.totalorder %s24, 1
      %p73 = por %p71, %p72
      %p75 = scmp.ne.s32.totalorder %s58, %s74
      %p76 = scmp.eq.s32.totalorder %s24, 0
      %p77 = por %p75, %p76
      %s78 = ssub.s32 %s18, %s25
      %p79 = scmp.eq.s32.totalorder %s78, 0
      %s81 = sadd.s32 %s80, 1
      %s82 = scalar_select %p79, %s80, %s81
      %p85 = pneg %p79
      %p86 = scmp.eq.s32.totalorder %s18, 1
      %p87 = por %p85, %p86
      %p88 = scmp.ne.s32.totalorder %s80, %s83
      %p89 = scmp.eq.s32.totalorder %s18, 0
      %p90 = por %p88, %p89
      %p91 = scmp.ne.s32.totalorder %s80, %s83
      %p92 = scmp.eq.s32.totalorder %s23, 1
      %p93 = por %p91, %p92
      %p94 = scmp.ne.s32.totalorder %s83, %s84
      %p95 = scmp.eq.s32.totalorder %s23, 0
      %p96 = por %p94, %p95
      %p97 = scmp.ne.s32.totalorder %s83, %s84
      %p98 = scmp.eq.s32.totalorder %s24, 1
      %p99 = por %p97, %p98
      %p101 = scmp.ne.s32.totalorder %s84, %s100
      %p102 = scmp.eq.s32.totalorder %s24, 0
      %p103 = por %p101, %p102
      %p104 = scmp.le.s32.totalorder 1, %s18
      %p105 = scmp.lt.s32.totalorder %s18, 3
      %p106 = pnand %p104, %p105
      %p107 = pneg %p106
      // Predicated region
      $region9: #{tpu_custom_call.1} parent=5 // pred_check
        _
      $region10: #{tpu_custom_call.1} parent=5 // pred_check_branch
        %109 = sbr.rel (%p106) target = $region12
      $region11: #{tpu_custom_call.1} parent=5 // pred_region
        %s110 = ssub.s32 %s18, 1
      $region12: #{tpu_custom_call.1} parent=5 // pred_fallthru
        _
      %p111 = scmp.lt.s32.totalorder %s18, 2
      // Predicated region
      $region13: #{tpu_custom_call.1} parent=5 // pred_check
        %p112 = pneg %p111
      $region14: #{tpu_custom_call.1} parent=5 // pred_check_branch
        %114 = sbr.rel (%p112) target = $region16
      $region15: #{tpu_custom_call.1} parent=5 // pred_region
        // Predicated region
        $region17: #{tpu_custom_call.1} parent=15 // pred_check
          %p115 = pneg %p38
        $region18: #{tpu_custom_call.1} parent=15 // pred_check_branch
          %117 = sbr.rel (%p115) target = $region20
        $region19: #{tpu_custom_call.1} parent=15 // pred_region
          %s118 = sand.u32 %s28, 1
          %s119 = scalar_lea.sflag [#allocation3], %s118
          %s120 = sand.u32 %s28, 1
          %s121 = smul.addr %s120, 64
          %s122 = scalar_lea.vmem [#allocation2], %s121
          %s123 = smul.u32 8, %s18
          %125 = vsyncadd %s119, 0
          %s126 = smul.addr %s123, 8
          %s127 = scalar_lea.hbm %s0, %s126
          %s128 = sshll.u32 %s127, 4
          %s129 = int_to_ptr.hbm [resolvable:$true] %s128
          %s130 = sshll.u32 %s122, 4
          %s131 = int_to_ptr.vmem [resolvable:$true] %s130
          %136 = dma.hbm_to_vmem [thread:$0]  %s129, 1024, %s131, %s119, 128, 128, 8
        $region20: #{tpu_custom_call.1} parent=15 // pred_fallthru
          _
      $region16: #{tpu_custom_call.1} parent=5 // pred_fallthru
        _
      %p137 = scmp.le.s32.totalorder 1, %s18
      %p138 = scmp.lt.s32.totalorder %s18, 3
      %p139 = pnand %p137, %p138
      %p140 = pneg %p139
      // Predicated region
      $region21: #{tpu_custom_call.1} parent=5 // pred_check
        _
      $region22: #{tpu_custom_call.1} parent=5 // pred_check_branch
        %142 = sbr.rel (%p139) target = $region24
      $region23: #{tpu_custom_call.1} parent=5 // pred_region
        %s143 = ssub.s32 %s18, 1
        %s144 = sand.u32 %s31, 1
        %s145 = scalar_lea.sflag [#allocation3], %s144
        %s146 = sand.u32 %s31, 1
        %s147 = smul.addr %s146, 64
        %s148 = scalar_lea.vmem [#allocation2], %s147
        // Predicated region
        $region25: #{tpu_custom_call.1} parent=23 // pred_check
          %p149 = pneg %p44
        $region26: #{tpu_custom_call.1} parent=23 // pred_check_branch
          %151 = sbr.rel (%p149) target = $region28
        $region27: #{tpu_custom_call.1} parent=23 // pred_region
          %153 = dma.done %s145, 1024
        $region28: #{tpu_custom_call.1} parent=23 // pred_fallthru
          _
        %s154 = sand.u32 %s31, 1
        %s155 = scalar_lea.sflag [#allocation3], %s154
        %s156 = sand.u32 %s31, 1
        %s157 = smul.addr %s156, 64
        %s158 = scalar_lea.vmem [#allocation2], %s157
        %p159 = pneg %p44
        %p160 = pneg %p41
        %p161 = pneg %p70
        %p162 = pneg %p67
        %s163 = sand.u32 %s57, 1
        %s164 = scalar_lea.sflag [#allocation4], %s163
        %s165 = sand.u32 %s57, 1
        %s166 = smul.addr %s165, 32
        %s167 = scalar_lea.vmem [#allocation5], %s166
        %p168 = pneg %p96
        %p169 = pneg %p93
        %s170 = sand.u32 %s83, 1
        %s171 = scalar_lea.sflag [#allocation7], %s170
        %s172 = sand.u32 %s83, 1
        %s173 = smul.addr %s172, 32
        %s174 = scalar_lea.vmem [#allocation6], %s173
        %s175 = smul.u32 8, %s23
        %s176 = smul.u32 8, %s23
        %s177 = smul.u32 8, %s23
        %v178 = vld [vmem:[%s148] sm:$0xff]
        %v179 = vld [vmem:[%s148 + $0x8] sm:$0xff]
        %v180 = vld [vmem:[%s148 + $0x10] sm:$0xff]
        %v181 = vld [vmem:[%s148 + $0x18] sm:$0xff]
        %v182 = vld [vmem:[%s148 + $0x20] sm:$0xff]
        %v183 = vld [vmem:[%s148 + $0x28] sm:$0xff]
        %v184 = vld [vmem:[%s148 + $0x30] sm:$0xff]
        %v185 = vld [vmem:[%s148 + $0x38] sm:$0xff]
        %186 = vmax.xlane.f32.xlu0 %v178
        %v187 = vpop.xlane.xlu0 %186
        %188 = vmax.xlane.f32.xlu0 %v179
        %v189 = vpop.xlane.xlu0 %188
        %190 = vmax.xlane.f32.xlu0 %v180
        %v191 = vpop.xlane.xlu0 %190
        %192 = vmax.xlane.f32.xlu0 %v181
        %v193 = vpop.xlane.xlu0 %192
        %194 = vmax.xlane.f32.xlu0 %v182
        %v195 = vpop.xlane.xlu0 %194
        %196 = vmax.xlane.f32.xlu0 %v183
        %v197 = vpop.xlane.xlu0 %196
        %198 = vmax.xlane.f32.xlu0 %v184
        %v199 = vpop.xlane.xlu0 %198
        %200 = vmax.xlane.f32.xlu0 %v185
        %v201 = vpop.xlane.xlu0 %200
        %v202 = vsub.f32 %v178, %v187
        %v203 = vsub.f32 %v179, %v189
        %v204 = vsub.f32 %v180, %v191
        %v205 = vsub.f32 %v181, %v193
        %v206 = vsub.f32 %v182, %v195
        %v207 = vsub.f32 %v183, %v197
        %v208 = vsub.f32 %v184, %v199
        %v209 = vsub.f32 %v185, %v201
        %v210 = vmul.f32 %v202, 1.442695
        %v211 = vpow.pop %v210
        %v212 = vmul.f32 %v203, 1.442695
        %v213 = vpow.pop %v212
        %v214 = vmul.f32 %v204, 1.442695
        %v215 = vpow.pop %v214
        %v216 = vmul.f32 %v205, 1.442695
        %v217 = vpow.pop %v216
        %v218 = vmul.f32 %v206, 1.442695
        %v219 = vpow.pop %v218
        %v220 = vmul.f32 %v207, 1.442695
        %v221 = vpow.pop %v220
        %v222 = vmul.f32 %v208, 1.442695
        %v223 = vpow.pop %v222
        %v224 = vmul.f32 %v209, 1.442695
        %v225 = vpow.pop %v224
        %226 = vadd.xlane.f32.xlu0 %v211
        %v227 = vpop.xlane.xlu0 %226
        %228 = vadd.xlane.f32.xlu0 %v213
        %v229 = vpop.xlane.xlu0 %228
        %230 = vadd.xlane.f32.xlu0 %v215
        %v231 = vpop.xlane.xlu0 %230
        %232 = vadd.xlane.f32.xlu0 %v217
        %v233 = vpop.xlane.xlu0 %232
        %234 = vadd.xlane.f32.xlu0 %v219
        %v235 = vpop.xlane.xlu0 %234
        %236 = vadd.xlane.f32.xlu0 %v221
        %v237 = vpop.xlane.xlu0 %236
        %238 = vadd.xlane.f32.xlu0 %v223
        %v239 = vpop.xlane.xlu0 %238
        %240 = vadd.xlane.f32.xlu0 %v225
        %v241 = vpop.xlane.xlu0 %240
        %v242 = vlog2.pop %v227
        %v243 = vmul.f32 %v242, 0.6931472
        %v244 = vlog2.pop %v229
        %v245 = vmul.f32 %v244, 0.6931472
        %v246 = vlog2.pop %v231
        %v247 = vmul.f32 %v246, 0.6931472
        %v248 = vlog2.pop %v233
        %v249 = vmul.f32 %v248, 0.6931472
        %v250 = vlog2.pop %v235
        %v251 = vmul.f32 %v250, 0.6931472
        %v252 = vlog2.pop %v237
        %v253 = vmul.f32 %v252, 0.6931472
        %v254 = vlog2.pop %v239
        %v255 = vmul.f32 %v254, 0.6931472
        %v256 = vlog2.pop %v241
        %v257 = vmul.f32 %v256, 0.6931472
        %v258 = vadd.f32 %v187, %v243
        %v259 = vadd.f32 %v189, %v245
        %v260 = vadd.f32 %v191, %v247
        %v261 = vadd.f32 %v193, %v249
        %v262 = vadd.f32 %v195, %v251
        %v263 = vadd.f32 %v197, %v253
        %v264 = vadd.f32 %v199, %v255
        %v265 = vadd.f32 %v201, %v257
        %v266 = vsub.f32 %v178, %v258
        %v267 = vsub.f32 %v179, %v259
        %v268 = vsub.f32 %v180, %v260
        %v269 = vsub.f32 %v181, %v261
        %v270 = vsub.f32 %v182, %v262
        %v271 = vsub.f32 %v183, %v263
        %v272 = vsub.f32 %v184, %v264
        %v273 = vsub.f32 %v185, %v265
        %v274 = vpack.c.bf16 %v266, %v266
        %v275 = vpack.c.bf16 %v267, %v267
        %v276 = vpack.c.bf16 %v268, %v268
        %v277 = vpack.c.bf16 %v269, %v269
        %v278 = vpack.c.bf16 %v270, %v270
        %v279 = vpack.c.bf16 %v271, %v271
        %v280 = vpack.c.bf16 %v272, %v272
        %v281 = vpack.c.bf16 %v273, %v273
        %v282 = vunpack.c.l.bf16 %v274
        %v283 = vunpack.c.l.bf16 %v275
        %v284 = vunpack.c.l.bf16 %v276
        %v285 = vunpack.c.l.bf16 %v277
        %v286 = vunpack.c.l.bf16 %v278
        %v287 = vunpack.c.l.bf16 %v279
        %v288 = vunpack.c.l.bf16 %v280
        %v289 = vunpack.c.l.bf16 %v281
        %v290 = vsub.f32 %v266, %v282
        %v291 = vsub.f32 %v267, %v283
        %v292 = vsub.f32 %v268, %v284
        %v293 = vsub.f32 %v269, %v285
        %v294 = vsub.f32 %v270, %v286
        %v295 = vsub.f32 %v271, %v287
        %v296 = vsub.f32 %v272, %v288
        %v297 = vsub.f32 %v273, %v289
        %v298 = vpack.c.bf16 %v290, %v290
        %v299 = vpack.c.bf16 %v291, %v291
        %v300 = vpack.c.bf16 %v292, %v292
        %v301 = vpack.c.bf16 %v293, %v293
        %v302 = vpack.c.bf16 %v294, %v294
        %v303 = vpack.c.bf16 %v295, %v295
        %v304 = vpack.c.bf16 %v296, %v296
        %v305 = vpack.c.bf16 %v297, %v297
        %306 = vst [vmem:[%s167] sm:$0xf] %v274
        %307 = vst [vmem:[%s167 + $0x4] sm:$0xf] %v275
        %308 = vst [vmem:[%s167 + $0x8] sm:$0xf] %v276
        %309 = vst [vmem:[%s167 + $0xc] sm:$0xf] %v277
        %310 = vst [vmem:[%s167 + $0x10] sm:$0xf] %v278
        %311 = vst [vmem:[%s167 + $0x14] sm:$0xf] %v279
        %312 = vst [vmem:[%s167 + $0x18] sm:$0xf] %v280
        %313 = vst [vmem:[%s167 + $0x1c] sm:$0xf] %v281
        %314 = vst [vmem:[%s174] sm:$0xf] %v298
        %315 = vst [vmem:[%s174 + $0x4] sm:$0xf] %v299
        %316 = vst [vmem:[%s174 + $0x8] sm:$0xf] %v300
        %317 = vst [vmem:[%s174 + $0xc] sm:$0xf] %v301
        %318 = vst [vmem:[%s174 + $0x10] sm:$0xf] %v302
        %319 = vst [vmem:[%s174 + $0x14] sm:$0xf] %v303
        %320 = vst [vmem:[%s174 + $0x18] sm:$0xf] %v304
        %321 = vst [vmem:[%s174 + $0x1c] sm:$0xf] %v305
        %s322 = sand.u32 %s57, 1
        %s323 = scalar_lea.sflag [#allocation4], %s322
        %s324 = sand.u32 %s57, 1
        %s325 = smul.addr %s324, 32
        %s326 = scalar_lea.vmem [#allocation5], %s325
        %s327 = sand.u32 %s83, 1
        %s328 = scalar_lea.sflag [#allocation7], %s327
        %s329 = sand.u32 %s83, 1
        %s330 = smul.addr %s329, 32
        %s331 = scalar_lea.vmem [#allocation6], %s330
        // Predicated region
        $region29: #{tpu_custom_call.1} parent=23 // pred_check
          %p332 = pneg %p67
        $region30: #{tpu_custom_call.1} parent=23 // pred_check_branch
          %334 = sbr.rel (%p332) target = $region32
        $region31: #{tpu_custom_call.1} parent=23 // pred_region
          %s335 = smul.u32 8, %s23
          %337 = vsyncadd %s323, 0
          %s338 = smul.addr %s335, 4
          %s339 = scalar_lea.hbm %s1, %s338
          %s340 = sshll.u32 %s326, 4
          %s341 = int_to_ptr.vmem [resolvable:$true] %s340
          %s342 = sshll.u32 %s339, 4
          %s343 = int_to_ptr.hbm [resolvable:$true] %s342
          %348 = dma.vmem_to_hbm [thread:$0]  %s341, 512, %s343, %s323, 64, 64, 4
        $region32: #{tpu_custom_call.1} parent=23 // pred_fallthru
          _
        // Predicated region
        $region33: #{tpu_custom_call.1} parent=23 // pred_check
          %p349 = pneg %p93
        $region34: #{tpu_custom_call.1} parent=23 // pred_check_branch
          %351 = sbr.rel (%p349) target = $region36
        $region35: #{tpu_custom_call.1} parent=23 // pred_region
          %s352 = smul.u32 8, %s23
          %354 = vsyncadd %s328, 0
          %s355 = smul.addr %s352, 4
          %s356 = scalar_lea.hbm %s2, %s355
          %s357 = sshll.u32 %s331, 4
          %s358 = int_to_ptr.vmem [resolvable:$true] %s357
          %s359 = sshll.u32 %s356, 4
          %s360 = int_to_ptr.hbm [resolvable:$true] %s359
          %365 = dma.vmem_to_hbm [thread:$0]  %s358, 512, %s360, %s328, 64, 64, 4
        $region36: #{tpu_custom_call.1} parent=23 // pred_fallthru
          _
      $region24: #{tpu_custom_call.1} parent=5 // pred_fallthru
        _
      %p366 = scmp.le.s32.totalorder 2, %s18
      // Predicated region
      $region37: #{tpu_custom_call.1} parent=5 // pred_check
        %p367 = pneg %p366
      $region38: #{tpu_custom_call.1} parent=5 // pred_check_branch
        %369 = sbr.rel (%p367) target = $region40
      $region39: #{tpu_custom_call.1} parent=5 // pred_region
        %s370 = ssub.s32 %s18, 2
        // Predicated region
        $region41: #{tpu_custom_call.1} parent=39 // pred_check
          %p371 = pneg %p73
        $region42: #{tpu_custom_call.1} parent=39 // pred_check_branch
          %373 = sbr.rel (%p371) target = $region44
        $region43: #{tpu_custom_call.1} parent=39 // pred_region
          %s374 = sand.u32 %s58, 1
          %s375 = scalar_lea.sflag [#allocation4], %s374
          %s376 = sand.u32 %s58, 1
          %s377 = smul.addr %s376, 32
          %s378 = scalar_lea.vmem [#allocation5], %s377
          %380 = dma.done %s375, 512
        $region44: #{tpu_custom_call.1} parent=39 // pred_fallthru
          _
        // Predicated region
        $region45: #{tpu_custom_call.1} parent=39 // pred_check
          %p381 = pneg %p99
        $region46: #{tpu_custom_call.1} parent=39 // pred_check_branch
          %383 = sbr.rel (%p381) target = $region48
        $region47: #{tpu_custom_call.1} parent=39 // pred_region
          %s384 = sand.u32 %s84, 1
          %s385 = scalar_lea.sflag [#allocation7], %s384
          %s386 = sand.u32 %s84, 1
          %s387 = smul.addr %s386, 32
          %s388 = scalar_lea.vmem [#allocation6], %s387
          %390 = dma.done %s385, 512
        $region48: #{tpu_custom_call.1} parent=39 // pred_fallthru
          _
      $region40: #{tpu_custom_call.1} parent=5 // pred_fallthru
        _
    $region6: #{tpu_custom_call.1} parent=1 // loop_footer
      %s22 = sadd.s32 1, %s18
    $region7: #{tpu_custom_call.1} parent=1 // loop_footer_branch
      %17 = sbr.rel target = $region3
    $region8: #{tpu_custom_call.1} parent=1 // loop_exit
      _
    %391 = vsyncpa [#allocation3], 1
    %s392 = scalar_lea.sflag [#allocation3], 1
    %393 = vsyncpa %s392, 1
    %394 = vsyncpa [#allocation4], 1
    %s395 = scalar_lea.sflag [#allocation4], 1
    %396 = vsyncpa %s395, 1
    %397 = vsyncpa [#allocation7], 1
    %s398 = scalar_lea.sflag [#allocation7], 1
    %399 = vsyncpa %s398, 1

</llo_original>
